<compile_context>
chip_gen: v5e
topology: v5e:2x2
jax: 0.10.0
libtpu: 0.0.40
codegen_flags: <defaults>
</compile_context>

<pallas_src>
import functools

import jax
import jax.numpy as jnp
from jax import lax
from jax.experimental import pallas as pl
from jax.experimental.pallas import tpu as pltpu

_F32_MIN = float(jnp.finfo(jnp.float32).min)


def _round_up(x, m):
    return (x + m - 1) // m * m


def _dot_t(x, y):
    # x @ y.T on the MXU without materializing a transpose.
    return lax.dot_general(
        x, y, (((1,), (1,)), ((), ())), preferred_element_type=jnp.float32
    )


def _row_stats(sim):
    """Per-row (max, sum(exp(. - max))) partials; safe for all -inf rows."""
    m = jnp.max(sim, axis=1, keepdims=True)
    m = jnp.maximum(m, jnp.float32(_F32_MIN))  # guard: all-masked row
    s = jnp.sum(jnp.exp(sim - m), axis=1, keepdims=True)
    return m, s


def _merge_lse(m1, s1, m2, s2):
    m = jnp.maximum(m1, m2)
    s = s1 * jnp.exp(m1 - m) + s2 * jnp.exp(m2 - m)
    return jnp.log(s) + m


def _infonce_kernel(a_ref, b_ref, asq_ref, bsq_ref,
                    lse1_ref, lse2_ref, diag_ref,
                    *, batch_size, tm, temperature):
    B = batch_size
    t2 = jnp.float32(temperature) * jnp.float32(temperature)
    neg_inf = jnp.float32(-jnp.inf)

    i = pl.program_id(0)
    row0 = pl.multiple_of(i * tm, 8)

    a_all = a_ref[...]                      # (Bp, D) f32, resident across grid
    b_all = b_ref[...]                      # (Bp, D)
    a_blk = a_ref[pl.ds(row0, tm), :]       # (tm, D) rows of this block
    b_blk = b_ref[pl.ds(row0, tm), :]       # (tm, D)
    asq = asq_ref[...]                      # (1, Bp) squared norms of a rows
    bsq = bsq_ref[...]                      # (1, Bp) squared norms of b rows

    Bp = a_all.shape[0]

    # Block-row squared norms: O(tm*D) VPU work (no eye-masked Gram reductions).
    na_blk = jnp.sum(a_blk * a_blk, axis=1, keepdims=True)   # (tm, 1)
    nb_blk = jnp.sum(b_blk * b_blk, axis=1, keepdims=True)   # (tm, 1)

    col = lax.broadcasted_iota(jnp.int32, (tm, Bp), 1)
    rowg = lax.broadcasted_iota(jnp.int32, (tm, Bp), 0) + row0
    valid = col < B                       # mask out zero-padded columns
    offdiag = valid & (col != rowg)       # additionally mask the self-pair

    def sim_strip(g, n_row, n_col, mask):
        # Fused: -t^2 * max(||x||^2 + ||y||^2 - 2 x.y, 0)  with masking.
        s = t2 * jnp.minimum(2.0 * g - n_row - n_col, 0.0)
        return jnp.where(mask, s, neg_inf)

    # lse2 rows (a rows of this block): hstack(sim_aa_masked, sim_ab)
    m_aa, s_aa = _row_stats(sim_strip(_dot_t(a_blk, a_all), na_blk, asq, offdiag))
    m_ab, s_ab = _row_stats(sim_strip(_dot_t(a_blk, b_all), na_blk, bsq, valid))
    lse2_ref[...] = _merge_lse(m_aa, s_aa, m_ab, s_ab)

    # lse1 rows (b rows of this block): hstack(sim_ab.T, sim_bb_masked)
    m_ba, s_ba = _row_stats(sim_strip(_dot_t(b_blk, a_all), nb_blk, asq, valid))
    m_bb, s_bb = _row_stats(sim_strip(_dot_t(b_blk, b_all), nb_blk, bsq, offdiag))
    lse1_ref[...] = _merge_lse(m_ba, s_ba, m_bb, s_bb)

    # diag(sim_ab) for tempered alignment, directly from the paired rows
    # (O(tm*D) elementwise, cheaper than extracting a diagonal from the strip).
    dab = jnp.sum(a_blk * b_blk, axis=1, keepdims=True)      # (tm, 1)
    diag_ref[...] = t2 * jnp.minimum(2.0 * dab - na_blk - nb_blk, 0.0)


def infonce_gaussian(features, temperature=1.0, block_rows=128):
    """features: (2*B, D) float array. Returns dict(loss=..., ta=..., ru=...)."""
    n, d = features.shape
    assert n % 2 == 0, "features must stack two views along dim 0"
    B = n // 2

    a = features[:B].astype(jnp.float32)
    b = features[B:].astype(jnp.float32)

    # Row tile: multiple of 8 (sublane), capped at block_rows.
    tm = block_rows if B >= block_rows else _round_up(B, 8)
    Bp = _round_up(B, tm)
    nb = Bp // tm
    if Bp != B:
        pad = Bp - B
        a = jnp.pad(a, ((0, pad), (0, 0)))
        b = jnp.pad(b, ((0, pad), (0, 0)))

    # Row-vector squared norms computed once (avoids a per-step sublane->lane
    # relayout inside the kernel).
    asq = jnp.sum(a * a, axis=1)[None, :]   # (1, Bp)
    bsq = jnp.sum(b * b, axis=1)[None, :]   # (1, Bp)

    kernel = functools.partial(
        _infonce_kernel, batch_size=B, tm=tm, temperature=float(temperature)
    )

    feat_spec = pl.BlockSpec((Bp, d), lambda i: (0, 0))   # resident, no re-DMA
    norm_spec = pl.BlockSpec((1, Bp), lambda i: (0, 0))
    out_spec = pl.BlockSpec((tm, 1), lambda i: (i, 0))

    lse1_rows, lse2_rows, diag_rows = pl.pallas_call(
        kernel,
        grid=(nb,),
        in_specs=[feat_spec, feat_spec, norm_spec, norm_spec],
        out_specs=(out_spec, out_spec, out_spec),
        out_shape=(
            jax.ShapeDtypeStruct((Bp, 1), jnp.float32),
            jax.ShapeDtypeStruct((Bp, 1), jnp.float32),
            jax.ShapeDtypeStruct((Bp, 1), jnp.float32),
        ),
        compiler_params=pltpu.CompilerParams(
            dimension_semantics=("parallel",),
            vmem_limit_bytes=48 * 1024 * 1024,
        ),
    )(a, b, asq, bsq)

    # Final tiny O(B) reduction stays in the XLA wrapper.
    lse1 = jnp.mean(lse1_rows[:B, 0])
    lse2 = jnp.mean(lse2_rows[:B, 0])
    tempered_alignment = jnp.sum(diag_rows[:B, 0]) / jnp.float32(B)
    raw_uniformity = lse1 + lse2
    loss = -(tempered_alignment - raw_uniformity / 2.0)
    return dict(loss=loss, ta=-tempered_alignment, ru=raw_uniformity / 2.0)


def _reference(features, temperature=1.0):
    # Pure-JAX reference mirroring the PyTorch forward.
    B = features.shape[0] // 2
    a, b = features[:B], features[B:]

    def sqdist(x, y):
        d2 = (
            jnp.sum(x * x, 1)[:, None]
            + jnp.sum(y * y, 1)[None, :]
            - 2.0 * x @ y.T
        )
        return jnp.maximum(d2, 0.0)

    t2 = temperature * temperature
    sim_aa = -t2 * sqdist(a, a)
    sim_bb = -t2 * sqdist(b, b)
    sim_ab = -t2 * sqdist(a, b)
    ta = jnp.trace(sim_ab) / B
    eye = jnp.eye(B, dtype=bool)
    sim_aa = jnp.where(eye, -jnp.inf, sim_aa)
    sim_bb = jnp.where(eye, -jnp.inf, sim_bb)
    lse1 = jax.scipy.special.logsumexp(jnp.hstack((sim_ab.T, sim_bb)), axis=1).mean()
    lse2 = jax.scipy.special.logsumexp(jnp.hstack((sim_aa, sim_ab)), axis=1).mean()
    ru = lse1 + lse2
    loss = -(ta - ru / 2.0)
    return dict(loss=loss, ta=-ta, ru=ru / 2.0)


if __name__ == "__main__":
    key = jax.random.PRNGKey(0)

    # Test 1: small, single block (B=8, D=32), default temperature.
    B, D = 8, 32
    features = jax.random.normal(key, (2 * B, D), dtype=jnp.float32)
    out = infonce_gaussian(features, temperature=1.0)
    jax.block_until_ready(out["loss"])
    ref = _reference(features, temperature=1.0)
    for k in ("loss", "ta", "ru"):
        assert jnp.allclose(out[k], ref[k], rtol=1e-4, atol=1e-3), (k, out[k], ref[k])

    # Test 2: multi-block grid with row padding (B=50, tm=16 -> Bp=64, 4 blocks).
    key2 = jax.random.PRNGKey(1)
    B2, D2 = 50, 16
    features2 = jax.random.normal(key2, (2 * B2, D2), dtype=jnp.float32)
    out2 = infonce_gaussian(features2, temperature=0.5, block_rows=16)
    jax.block_until_ready(out2["loss"])
    ref2 = _reference(features2, temperature=0.5)
    for k in ("loss", "ta", "ru"):
        assert jnp.allclose(out2[k], ref2[k], rtol=1e-4, atol=1e-3), (k, out2[k], ref2[k])

    print("KERNEL_OK")
</pallas_src>

<mosaic_0001>
module attributes {stable_mosaic.version = 11 : i64} {
  func.func @_infonce_kernel(%arg0: i32, %arg1: memref<8x32xf32, #tpu.memory_space<vmem>>, %arg2: memref<8x32xf32, #tpu.memory_space<vmem>>, %arg3: memref<1x8xf32, #tpu.memory_space<vmem>>, %arg4: memref<1x8xf32, #tpu.memory_space<vmem>>, %arg5: memref<8x1xf32, #tpu.memory_space<vmem>>, %arg6: memref<8x1xf32, #tpu.memory_space<vmem>>, %arg7: memref<8x1xf32, #tpu.memory_space<vmem>>) attributes {dimension_semantics = [#tpu.dimension_semantics<parallel>], iteration_bounds = array<i64: 1>, scalar_prefetch = 0 : i64, scratch_operands = 0 : i64, tpu.core_type = #tpu.core_type<tc>, window_params = [{pipeline_mode = #tpu.pipeline_mode<synchronous>, transform_indices = @transform_0, window_bounds = array<i64: 8, 32>}, {pipeline_mode = #tpu.pipeline_mode<synchronous>, transform_indices = @transform_1, window_bounds = array<i64: 8, 32>}, {pipeline_mode = #tpu.pipeline_mode<synchronous>, transform_indices = @transform_2, window_bounds = array<i64: 1, 8>}, {pipeline_mode = #tpu.pipeline_mode<synchronous>, transform_indices = @transform_3, window_bounds = array<i64: 1, 8>}, {transform_indices = @transform_4, window_bounds = array<i64: 8, 1>}, {transform_indices = @transform_5, window_bounds = array<i64: 8, 1>}, {transform_indices = @transform_6, window_bounds = array<i64: 8, 1>}]} {
    %cst = arith.constant 1.000000e+00 : f32
    %cst_0 = arith.constant 1.000000e+00 : f32
    %0 = arith.mulf %cst, %cst_0 : f32
    %c8_i32 = arith.constant 8 : i32
    %1 = arith.muli %arg0, %c8_i32 : i32
    %2 = tpu.assume_multiple %1, 8 : i32
    %c0 = arith.constant 0 : index
    %c0_1 = arith.constant 0 : index
    %3 = vector.load %arg1[%c0, %c0_1] : memref<8x32xf32, #tpu.memory_space<vmem>>, vector<8x32xf32>
    %c0_2 = arith.constant 0 : index
    %c0_3 = arith.constant 0 : index
    %4 = vector.load %arg2[%c0_2, %c0_3] : memref<8x32xf32, #tpu.memory_space<vmem>>, vector<8x32xf32>
    %5 = arith.index_cast %2 : i32 to index
    %c0_4 = arith.constant 0 : index
    %6 = vector.load %arg1[%5, %c0_4] : memref<8x32xf32, #tpu.memory_space<vmem>>, vector<8x32xf32>
    %7 = arith.index_cast %2 : i32 to index
    %c0_5 = arith.constant 0 : index
    %8 = vector.load %arg2[%7, %c0_5] : memref<8x32xf32, #tpu.memory_space<vmem>>, vector<8x32xf32>
    %c0_6 = arith.constant 0 : index
    %c0_7 = arith.constant 0 : index
    %9 = vector.load %arg3[%c0_6, %c0_7] : memref<1x8xf32, #tpu.memory_space<vmem>>, vector<1x8xf32>
    %c0_8 = arith.constant 0 : index
    %c0_9 = arith.constant 0 : index
    %10 = vector.load %arg4[%c0_8, %c0_9] : memref<1x8xf32, #tpu.memory_space<vmem>>, vector<1x8xf32>
    %11 = arith.mulf %6, %6 : vector<8x32xf32>
    %cst_10 = arith.constant dense<0.000000e+00> : vector<8xf32>
    %12 = vector.multi_reduction <add>, %11, %cst_10 [1] : vector<8x32xf32> to vector<8xf32>
    %13 = vector.shape_cast %12 : vector<8xf32> to vector<8x1xf32>
    %14 = arith.mulf %8, %8 : vector<8x32xf32>
    %cst_11 = arith.constant dense<0.000000e+00> : vector<8xf32>
    %15 = vector.multi_reduction <add>, %14, %cst_11 [1] : vector<8x32xf32> to vector<8xf32>
    %16 = vector.shape_cast %15 : vector<8xf32> to vector<8x1xf32>
    %17 = tpu.iota {dimensions = array<i32: 1>} : vector<8x8xi32>
    %18 = tpu.iota {dimensions = array<i32: 0>} : vector<8x8xi32>
    %19 = vector.broadcast %2 : i32 to vector<8x8xi32>
    %20 = arith.addi %18, %19 : vector<8x8xi32>
    %c8_i32_12 = arith.constant 8 : i32
    %21 = vector.broadcast %c8_i32_12 : i32 to vector<8x8xi32>
    %22 = arith.cmpi slt, %17, %21 : vector<8x8xi32>
    %23 = arith.cmpi ne, %17, %20 : vector<8x8xi32>
    %24 = arith.andi %22, %23 : vector<8x8xi1>
    %cst_13 = arith.constant dense<0.000000e+00> : vector<8x8xf32>
    %25 = tpu.matmul %6, %3, %cst_13 {dimension_numbers = #tpu.dot_dimension_numbers<[1], [1], [0], [0], [0, 0, 1, 0], [], []>} : vector<8x32xf32>, vector<8x32xf32>, vector<8x8xf32> -> vector<8x8xf32>
    %cst_14 = arith.constant 2.000000e+00 : f32
    %26 = vector.broadcast %cst_14 : f32 to vector<8x8xf32>
    %27 = arith.mulf %26, %25 : vector<8x8xf32>
    %28 = vector.broadcast %13 : vector<8x1xf32> to vector<8x8xf32>
    %29 = arith.subf %27, %28 : vector<8x8xf32>
    %30 = vector.broadcast %9 : vector<1x8xf32> to vector<8x8xf32>
    %31 = arith.subf %29, %30 : vector<8x8xf32>
    %cst_15 = arith.constant 0.000000e+00 : f32
    %32 = vector.broadcast %cst_15 : f32 to vector<8x8xf32>
    %33 = arith.minimumf %31, %32 : vector<8x8xf32>
    %34 = vector.broadcast %0 : f32 to vector<8x8xf32>
    %35 = arith.mulf %34, %33 : vector<8x8xf32>
    %cst_16 = arith.constant 0xFF800000 : f32
    %36 = vector.broadcast %cst_16 : f32 to vector<8x8xf32>
    %37 = arith.select %24, %35, %36 : vector<8x8xi1>, vector<8x8xf32>
    %cst_17 = arith.constant dense<0xFF800000> : vector<8xf32>
    %38 = vector.multi_reduction <maximumf>, %37, %cst_17 [1] : vector<8x8xf32> to vector<8xf32>
    %39 = vector.shape_cast %38 : vector<8xf32> to vector<8x1xf32>
    %cst_18 = arith.constant -3.40282347E+38 : f32
    %40 = vector.broadcast %cst_18 : f32 to vector<8x1xf32>
    %41 = arith.maximumf %39, %40 : vector<8x1xf32>
    %42 = vector.broadcast %41 : vector<8x1xf32> to vector<8x8xf32>
    %43 = arith.subf %37, %42 : vector<8x8xf32>
    %44 = math.exp %43 : vector<8x8xf32>
    %cst_19 = arith.constant dense<0.000000e+00> : vector<8xf32>
    %45 = vector.multi_reduction <add>, %44, %cst_19 [1] : vector<8x8xf32> to vector<8xf32>
    %46 = vector.shape_cast %45 : vector<8xf32> to vector<8x1xf32>
    %cst_20 = arith.constant dense<0.000000e+00> : vector<8x8xf32>
    %47 = tpu.matmul %6, %4, %cst_20 {dimension_numbers = #tpu.dot_dimension_numbers<[1], [1], [0], [0], [0, 0, 1, 0], [], []>} : vector<8x32xf32>, vector<8x32xf32>, vector<8x8xf32> -> vector<8x8xf32>
    %cst_21 = arith.constant 2.000000e+00 : f32
    %48 = vector.broadcast %cst_21 : f32 to vector<8x8xf32>
    %49 = arith.mulf %48, %47 : vector<8x8xf32>
    %50 = vector.broadcast %13 : vector<8x1xf32> to vector<8x8xf32>
    %51 = arith.subf %49, %50 : vector<8x8xf32>
    %52 = vector.broadcast %10 : vector<1x8xf32> to vector<8x8xf32>
    %53 = arith.subf %51, %52 : vector<8x8xf32>
    %cst_22 = arith.constant 0.000000e+00 : f32
    %54 = vector.broadcast %cst_22 : f32 to vector<8x8xf32>
    %55 = arith.minimumf %53, %54 : vector<8x8xf32>
    %56 = vector.broadcast %0 : f32 to vector<8x8xf32>
    %57 = arith.mulf %56, %55 : vector<8x8xf32>
    %cst_23 = arith.constant 0xFF800000 : f32
    %58 = vector.broadcast %cst_23 : f32 to vector<8x8xf32>
    %59 = arith.select %22, %57, %58 : vector<8x8xi1>, vector<8x8xf32>
    %cst_24 = arith.constant dense<0xFF800000> : vector<8xf32>
    %60 = vector.multi_reduction <maximumf>, %59, %cst_24 [1] : vector<8x8xf32> to vector<8xf32>
    %61 = vector.shape_cast %60 : vector<8xf32> to vector<8x1xf32>
    %cst_25 = arith.constant -3.40282347E+38 : f32
    %62 = vector.broadcast %cst_25 : f32 to vector<8x1xf32>
    %63 = arith.maximumf %61, %62 : vector<8x1xf32>
    %64 = vector.broadcast %63 : vector<8x1xf32> to vector<8x8xf32>
    %65 = arith.subf %59, %64 : vector<8x8xf32>
    %66 = math.exp %65 : vector<8x8xf32>
    %cst_26 = arith.constant dense<0.000000e+00> : vector<8xf32>
    %67 = vector.multi_reduction <add>, %66, %cst_26 [1] : vector<8x8xf32> to vector<8xf32>
    %68 = vector.shape_cast %67 : vector<8xf32> to vector<8x1xf32>
    %69 = arith.maximumf %41, %63 : vector<8x1xf32>
    %70 = arith.subf %41, %69 : vector<8x1xf32>
    %71 = math.exp %70 : vector<8x1xf32>
    %72 = arith.mulf %46, %71 : vector<8x1xf32>
    %73 = arith.subf %63, %69 : vector<8x1xf32>
    %74 = math.exp %73 : vector<8x1xf32>
    %75 = arith.mulf %68, %74 : vector<8x1xf32>
    %76 = arith.addf %72, %75 : vector<8x1xf32>
    %77 = math.log %76 : vector<8x1xf32>
    %78 = arith.addf %77, %69 : vector<8x1xf32>
    %c0_27 = arith.constant 0 : index
    %c0_28 = arith.constant 0 : index
    %79 = vector.load %arg6[%c0_27, %c0_28] : memref<8x1xf32, #tpu.memory_space<vmem>>, vector<8x1xf32>
    tpu.vector_store %arg6[%c0_27, %c0_28], %78 {strides = array<i32>} : memref<8x1xf32, #tpu.memory_space<vmem>>, vector<8x1xf32>,
    %cst_29 = arith.constant dense<0.000000e+00> : vector<8x8xf32>
    %80 = tpu.matmul %8, %3, %cst_29 {dimension_numbers = #tpu.dot_dimension_numbers<[1], [1], [0], [0], [0, 0, 1, 0], [], []>} : vector<8x32xf32>, vector<8x32xf32>, vector<8x8xf32> -> vector<8x8xf32>
    %cst_30 = arith.constant 2.000000e+00 : f32
    %81 = vector.broadcast %cst_30 : f32 to vector<8x8xf32>
    %82 = arith.mulf %81, %80 : vector<8x8xf32>
    %83 = vector.broadcast %16 : vector<8x1xf32> to vector<8x8xf32>
    %84 = arith.subf %82, %83 : vector<8x8xf32>
    %85 = vector.broadcast %9 : vector<1x8xf32> to vector<8x8xf32>
    %86 = arith.subf %84, %85 : vector<8x8xf32>
    %cst_31 = arith.constant 0.000000e+00 : f32
    %87 = vector.broadcast %cst_31 : f32 to vector<8x8xf32>
    %88 = arith.minimumf %86, %87 : vector<8x8xf32>
    %89 = vector.broadcast %0 : f32 to vector<8x8xf32>
    %90 = arith.mulf %89, %88 : vector<8x8xf32>
    %cst_32 = arith.constant 0xFF800000 : f32
    %91 = vector.broadcast %cst_32 : f32 to vector<8x8xf32>
    %92 = arith.select %22, %90, %91 : vector<8x8xi1>, vector<8x8xf32>
    %cst_33 = arith.constant dense<0xFF800000> : vector<8xf32>
    %93 = vector.multi_reduction <maximumf>, %92, %cst_33 [1] : vector<8x8xf32> to vector<8xf32>
    %94 = vector.shape_cast %93 : vector<8xf32> to vector<8x1xf32>
    %cst_34 = arith.constant -3.40282347E+38 : f32
    %95 = vector.broadcast %cst_34 : f32 to vector<8x1xf32>
    %96 = arith.maximumf %94, %95 : vector<8x1xf32>
    %97 = vector.broadcast %96 : vector<8x1xf32> to vector<8x8xf32>
    %98 = arith.subf %92, %97 : vector<8x8xf32>
    %99 = math.exp %98 : vector<8x8xf32>
    %cst_35 = arith.constant dense<0.000000e+00> : vector<8xf32>
    %100 = vector.multi_reduction <add>, %99, %cst_35 [1] : vector<8x8xf32> to vector<8xf32>
    %101 = vector.shape_cast %100 : vector<8xf32> to vector<8x1xf32>
    %cst_36 = arith.constant dense<0.000000e+00> : vector<8x8xf32>
    %102 = tpu.matmul %8, %4, %cst_36 {dimension_numbers = #tpu.dot_dimension_numbers<[1], [1], [0], [0], [0, 0, 1, 0], [], []>} : vector<8x32xf32>, vector<8x32xf32>, vector<8x8xf32> -> vector<8x8xf32>
    %cst_37 = arith.constant 2.000000e+00 : f32
    %103 = vector.broadcast %cst_37 : f32 to vector<8x8xf32>
    %104 = arith.mulf %103, %102 : vector<8x8xf32>
    %105 = vector.broadcast %16 : vector<8x1xf32> to vector<8x8xf32>
    %106 = arith.subf %104, %105 : vector<8x8xf32>
    %107 = vector.broadcast %10 : vector<1x8xf32> to vector<8x8xf32>
    %108 = arith.subf %106, %107 : vector<8x8xf32>
    %cst_38 = arith.constant 0.000000e+00 : f32
    %109 = vector.broadcast %cst_38 : f32 to vector<8x8xf32>
    %110 = arith.minimumf %108, %109 : vector<8x8xf32>
    %111 = vector.broadcast %0 : f32 to vector<8x8xf32>
    %112 = arith.mulf %111, %110 : vector<8x8xf32>
    %cst_39 = arith.constant 0xFF800000 : f32
    %113 = vector.broadcast %cst_39 : f32 to vector<8x8xf32>
    %114 = arith.select %24, %112, %113 : vector<8x8xi1>, vector<8x8xf32>
    %cst_40 = arith.constant dense<0xFF800000> : vector<8xf32>
    %115 = vector.multi_reduction <maximumf>, %114, %cst_40 [1] : vector<8x8xf32> to vector<8xf32>
    %116 = vector.shape_cast %115 : vector<8xf32> to vector<8x1xf32>
    %cst_41 = arith.constant -3.40282347E+38 : f32
    %117 = vector.broadcast %cst_41 : f32 to vector<8x1xf32>
    %118 = arith.maximumf %116, %117 : vector<8x1xf32>
    %119 = vector.broadcast %118 : vector<8x1xf32> to vector<8x8xf32>
    %120 = arith.subf %114, %119 : vector<8x8xf32>
    %121 = math.exp %120 : vector<8x8xf32>
    %cst_42 = arith.constant dense<0.000000e+00> : vector<8xf32>
    %122 = vector.multi_reduction <add>, %121, %cst_42 [1] : vector<8x8xf32> to vector<8xf32>
    %123 = vector.shape_cast %122 : vector<8xf32> to vector<8x1xf32>
    %124 = arith.maximumf %96, %118 : vector<8x1xf32>
    %125 = arith.subf %96, %124 : vector<8x1xf32>
    %126 = math.exp %125 : vector<8x1xf32>
    %127 = arith.mulf %101, %126 : vector<8x1xf32>
    %128 = arith.subf %118, %124 : vector<8x1xf32>
    %129 = math.exp %128 : vector<8x1xf32>
    %130 = arith.mulf %123, %129 : vector<8x1xf32>
    %131 = arith.addf %127, %130 : vector<8x1xf32>
    %132 = math.log %131 : vector<8x1xf32>
    %133 = arith.addf %132, %124 : vector<8x1xf32>
    %c0_43 = arith.constant 0 : index
    %c0_44 = arith.constant 0 : index
    %134 = vector.load %arg5[%c0_43, %c0_44] : memref<8x1xf32, #tpu.memory_space<vmem>>, vector<8x1xf32>
    tpu.vector_store %arg5[%c0_43, %c0_44], %133 {strides = array<i32>} : memref<8x1xf32, #tpu.memory_space<vmem>>, vector<8x1xf32>,
    %135 = arith.mulf %6, %8 : vector<8x32xf32>
    %cst_45 = arith.constant dense<0.000000e+00> : vector<8xf32>
    %136 = vector.multi_reduction <add>, %135, %cst_45 [1] : vector<8x32xf32> to vector<8xf32>
    %137 = vector.shape_cast %136 : vector<8xf32> to vector<8x1xf32>
    %cst_46 = arith.constant 2.000000e+00 : f32
    %138 = vector.broadcast %cst_46 : f32 to vector<8x1xf32>
    %139 = arith.mulf %138, %137 : vector<8x1xf32>
    %140 = arith.subf %139, %13 : vector<8x1xf32>
    %141 = arith.subf %140, %16 : vector<8x1xf32>
    %cst_47 = arith.constant 0.000000e+00 : f32
    %142 = vector.broadcast %cst_47 : f32 to vector<8x1xf32>
    %143 = arith.minimumf %141, %142 : vector<8x1xf32>
    %144 = vector.broadcast %0 : f32 to vector<8x1xf32>
    %145 = arith.mulf %144, %143 : vector<8x1xf32>
    %c0_48 = arith.constant 0 : index
    %c0_49 = arith.constant 0 : index
    %146 = vector.load %arg7[%c0_48, %c0_49] : memref<8x1xf32, #tpu.memory_space<vmem>>, vector<8x1xf32>
    tpu.vector_store %arg7[%c0_48, %c0_49], %145 {strides = array<i32>} : memref<8x1xf32, #tpu.memory_space<vmem>>, vector<8x1xf32>,
    return
  }
  func.func @transform_0(%arg0: i32) -> (i32, i32) {
    %c0_i32 = arith.constant 0 : i32
    %c0_i32_0 = arith.constant 0 : i32
    %c0_i32_1 = arith.constant 0 : i32
    return %c0_i32, %c0_i32_0 : i32, i32
  }
  func.func @transform_1(%arg0: i32) -> (i32, i32) {
    %c0_i32 = arith.constant 0 : i32
    %c0_i32_0 = arith.constant 0 : i32
    %c0_i32_1 = arith.constant 0 : i32
    return %c0_i32, %c0_i32_0 : i32, i32
  }
  func.func @transform_2(%arg0: i32) -> (i32, i32) {
    %c0_i32 = arith.constant 0 : i32
    %c0_i32_0 = arith.constant 0 : i32
    %c0_i32_1 = arith.constant 0 : i32
    return %c0_i32, %c0_i32_0 : i32, i32
  }
  func.func @transform_3(%arg0: i32) -> (i32, i32) {
    %c0_i32 = arith.constant 0 : i32
    %c0_i32_0 = arith.constant 0 : i32
    %c0_i32_1 = arith.constant 0 : i32
    return %c0_i32, %c0_i32_0 : i32, i32
  }
  func.func @transform_4(%arg0: i32) -> (i32, i32) {
    %c0_i32 = arith.constant 0 : i32
    %c0_i32_0 = arith.constant 0 : i32
    return %arg0, %c0_i32 : i32, i32
  }
  func.func @transform_5(%arg0: i32) -> (i32, i32) {
    %c0_i32 = arith.constant 0 : i32
    %c0_i32_0 = arith.constant 0 : i32
    return %arg0, %c0_i32 : i32, i32
  }
  func.func @transform_6(%arg0: i32) -> (i32, i32) {
    %c0_i32 = arith.constant 0 : i32
    %c0_i32_0 = arith.constant 0 : i32
    return %arg0, %c0_i32 : i32, i32
  }
}

</mosaic_0001>

<llo_original>
// kernel: tpu_custom_call.1
$region0: #{tpu_custom_call.1}
  #allocation0 [shape = 'u32[]', space=smem, size = 0x4, offset = 0x4, fixed_abs, tag = 'smem constant byte address 0x4 - core index']
  #allocation1 [shape = 'u32[72,128]{1,0:T(1,128)}', space=vmem, size = 0x9000, scoped, tag = 'internal scratch']
  %s0 = inlined_call_operand.hbm [shape: f32[8,32], index: 0, kind: input, shape index: {}]
  %s1 = inlined_call_operand.hbm [shape: f32[8,32], index: 1, kind: input, shape index: {}]
  %s2 = inlined_call_operand.vmem [shape: f32[1,8], index: 2, kind: input, shape index: {}]
  %s3 = inlined_call_operand.vmem [shape: f32[1,8], index: 3, kind: input, shape index: {}]
  %s4 = inlined_call_operand.vmem [shape: f32[8,1], index: 4, kind: output, shape index: {0}]
  %s5 = inlined_call_operand.vmem [shape: f32[8,1], index: 5, kind: output, shape index: {1}]
  %s6 = inlined_call_operand.vmem [shape: f32[8,1], index: 6, kind: output, shape index: {2}]
  %7 = xla_tuple %s4, %s5, %s6
  %s8 = sld [smem:[#allocation0]]
  $region50: #{tpu_custom_call.1} parent=0
    _
  %s10 = ssub.s32 1, %s8
  %s11 = scalar_select 0, %s10, %s8
  $region1: #{tpu_custom_call.1} parent=0
    #allocation2 [shape = 'u8[4096]{0}', space=vmem, size = 0x1000, scoped, tag = 'input window, operand 0, single buffered']
    #allocation3 [shape = 's32[1]{0}', space=sflag, size = 0x4, scoped, tag = 'scoped memory for tpu_custom_call.1']
    #allocation4 [shape = 'u8[4096]{0}', space=vmem, size = 0x1000, scoped, tag = 'input window, operand 1, single buffered']
    #allocation5 [shape = 's32[1]{0}', space=sflag, size = 0x4, scoped, tag = 'scoped memory for tpu_custom_call.1']
    %12 = vsyncpa [#allocation3], 0
    %13 = vsyncpa [#allocation5], 0
    // Predicated region
    $region2: #{tpu_custom_call.1} parent=1 // pred_check
      _
    $region3: #{tpu_custom_call.1} parent=1 // pred_check_branch
      %15 = sbr.rel (0) target = $region5
    $region4: #{tpu_custom_call.1} parent=1 // pred_region
      %17 = vsyncadd [#allocation3], 0
      %s19 = sshll.u32 %s0, 4
      %s20 = int_to_ptr.hbm [resolvable:$true] %s19
      %s21 = sshll.u32 [#allocation2], 4
      %s22 = int_to_ptr.vmem [resolvable:$true] %s21
      %24 = dma.hbm_to_vmem [thread:$0]  %s20, 128, %s22, [#allocation3]
    $region5: #{tpu_custom_call.1} parent=1 // pred_fallthru
      _
    // Predicated region
    $region6: #{tpu_custom_call.1} parent=1 // pred_check
      _
    $region7: #{tpu_custom_call.1} parent=1 // pred_check_branch
      %26 = sbr.rel (0) target = $region9
    $region8: #{tpu_custom_call.1} parent=1 // pred_region
      %28 = vsyncadd [#allocation5], 0
      %s30 = sshll.u32 %s1, 4
      %s31 = int_to_ptr.hbm [resolvable:$true] %s30
      %s32 = sshll.u32 [#allocation4], 4
      %s33 = int_to_ptr.vmem [resolvable:$true] %s32
      %35 = dma.hbm_to_vmem [thread:$0]  %s31, 128, %s33, [#allocation5]
    $region9: #{tpu_custom_call.1} parent=1 // pred_fallthru
      _
    // Predicated region
    $region10: #{tpu_custom_call.1} parent=1 // pred_check
      _
    $region11: #{tpu_custom_call.1} parent=1 // pred_check_branch
      %37 = sbr.rel (0) target = $region13
    $region12: #{tpu_custom_call.1} parent=1 // pred_region
      _
    $region13: #{tpu_custom_call.1} parent=1 // pred_fallthru
      _
    // Predicated region
    $region14: #{tpu_custom_call.1} parent=1 // pred_check
      _
    $region15: #{tpu_custom_call.1} parent=1 // pred_check_branch
      %39 = sbr.rel (0) target = $region17
    $region16: #{tpu_custom_call.1} parent=1 // pred_region
      _
    $region17: #{tpu_custom_call.1} parent=1 // pred_fallthru
      _
    // Predicated region
    $region18: #{tpu_custom_call.1} parent=1 // pred_check
      _
    $region19: #{tpu_custom_call.1} parent=1 // pred_check_branch
      %41 = sbr.rel (0) target = $region21
    $region20: #{tpu_custom_call.1} parent=1 // pred_region
      %43 = dma.done [#allocation3], 128
    $region21: #{tpu_custom_call.1} parent=1 // pred_fallthru
      _
    // Predicated region
    $region22: #{tpu_custom_call.1} parent=1 // pred_check
      _
    $region23: #{tpu_custom_call.1} parent=1 // pred_check_branch
      %45 = sbr.rel (0) target = $region25
    $region24: #{tpu_custom_call.1} parent=1 // pred_region
      %47 = dma.done [#allocation5], 128
    $region25: #{tpu_custom_call.1} parent=1 // pred_fallthru
      _
    %s48 = smul.u32 0, 8
    %v49 = vld [vmem:[#allocation2] sm:$0xff]
    %v50 = vld [vmem:[#allocation4] sm:$0xff]
    %s51 = scalar_lea.vmem [#allocation2], %s48
    %v52 = vld [vmem:[%s51] sm:$0xff]
    %s53 = scalar_lea.vmem [#allocation4], %s48
    %v54 = vld [vmem:[%s53] sm:$0xff]
    %v55 = vld [vmem:[%s2] sm:$0x1]
    %v56 = vld [vmem:[%s3] sm:$0x1]
    %v57 = vmul.f32 %v52, %v52
    %vm58 = vcmask 261120
    %v59 = vsel %vm58, %v57, 0.0
    %60 = vadd.xlane.f32.xlu0 %v59
    %v61 = vpop.xlane.xlu0 %60
    %v62 = vmul.f32 %v54, %v54
    %v63 = vsel %vm58, %v62, 0.0
    %64 = vadd.xlane.f32.xlu0 %v63
    %v65 = vpop.xlane.xlu0 %64
    %v66 = vlaneseq
    %v67 = vand.u32 %v66, 127
    %v68 = vlaneseq
    %v69 = vshrl.u32 %v68, 7
    %v70 = vstv %s48
    %v71 = vadd.s32 %v69, %v70
    %vm72 = vcmp.lt.s32.totalorder %v67, 8
    %vm73 = vcmp.ne.s32.totalorder %v67, %v71
    %vm74 = vmand %vm72, %vm73
    %v76 = vsel %vm58, %v52, 0
    %v79 = vsel %vm58, %v49, 0
    %81 = vmatpush.xpose.msra.mxu0 0.0
    %82 = vmatpush.xpose.msra.mxu0 0.0
    %83 = vmatpush.xpose.msra.mxu0 0.0
    %84 = vmatpush.xpose.msra.mxu0 0.0
    %85 = vmatpush.xpose.msra.mxu0 0.0
    %86 = vmatpush.xpose.msra.mxu0 0.0
    %87 = vmatpush.xpose.msra.mxu0 0.0
    %88 = vmatpush.xpose.msra.mxu0 0.0
    %89 = vmatpush.xpose.msra.mxu0 0.0
    %90 = vmatpush.xpose.msra.mxu0 0.0
    %91 = vmatpush.xpose.msra.mxu0 0.0
    %92 = vmatpush.xpose.msra.mxu0 0.0
    %93 = vmatpush.xpose.msra.mxu0 0.0
    %94 = vmatpush.xpose.msra.mxu0 0.0
    %95 = vmatpush.xpose.msra.mxu0 0.0
    %96 = vmatpush.xpose.msra.mxu0 %v79
    %97 = vmatmul.f32.gmra.mxu0 %v76
    %v98 = vpop.f32.mrf.mxu0
    %v99 = vadd.f32 0.0, %v98
    %100 = vdwg.mxu0
    %v101 = vmul.f32 %v99, 2.0
    %v102 = vsub.f32 %v101, %v61
    %v104 = vperm.slane %v55, 0
    %v106 = vsub.f32 %v102, %v104
    %v107 = vmin.f32 %v106, 0.0
    %v108 = vsel %vm74, %v107, -inf
    %vm109 = vcmask 64512
    %v110 = vsel %vm109, %v108, -inf
    %111 = vmax.xlane.f32.xlu0 %v110
    %v112 = vpop.xlane.xlu0 %111
    %v113 = vmax.f32 %v112, -3.4028235e+38
    %v114 = vsub.f32 %v108, %v113
    %v115 = vmul.f32 %v114, 1.442695
    %v116 = vpow.pop %v115
    %v117 = vsel %vm109, %v116, 0.0
    %118 = vadd.xlane.f32.xlu0 %v117
    %v119 = vpop.xlane.xlu0 %118
    %v121 = vsel %vm58, %v50, 0
    %123 = vmatpush.xpose.msra.mxu0 0.0
    %124 = vmatpush.xpose.msra.mxu0 0.0
    %125 = vmatpush.xpose.msra.mxu0 0.0
    %126 = vmatpush.xpose.msra.mxu0 0.0
    %127 = vmatpush.xpose.msra.mxu0 0.0
    %128 = vmatpush.xpose.msra.mxu0 0.0
    %129 = vmatpush.xpose.msra.mxu0 0.0
    %130 = vmatpush.xpose.msra.mxu0 0.0
    %131 = vmatpush.xpose.msra.mxu0 0.0
    %132 = vmatpush.xpose.msra.mxu0 0.0
    %133 = vmatpush.xpose.msra.mxu0 0.0
    %134 = vmatpush.xpose.msra.mxu0 0.0
    %135 = vmatpush.xpose.msra.mxu0 0.0
    %136 = vmatpush.xpose.msra.mxu0 0.0
    %137 = vmatpush.xpose.msra.mxu0 0.0
    %138 = vmatpush.xpose.msra.mxu0 %v121
    %139 = vmatmul.f32.gmra.mxu0 %v76
    %v140 = vpop.f32.mrf.mxu0
    %v141 = vadd.f32 0.0, %v140
    %142 = vdwg.mxu0
    %v143 = vmul.f32 %v141, 2.0
    %v144 = vsub.f32 %v143, %v61
    %v146 = vperm.slane %v56, 0
    %v148 = vsub.f32 %v144, %v146
    %v149 = vmin.f32 %v148, 0.0
    %v150 = vsel %vm72, %v149, -inf
    %v151 = vsel %vm109, %v150, -inf
    %152 = vmax.xlane.f32.xlu0 %v151
    %v153 = vpop.xlane.xlu0 %152
    %v154 = vmax.f32 %v153, -3.4028235e+38
    %v155 = vsub.f32 %v150, %v154
    %v156 = vmul.f32 %v155, 1.442695
    %v157 = vpow.pop %v156
    %v158 = vsel %vm109, %v157, 0.0
    %159 = vadd.xlane.f32.xlu0 %v158
    %v160 = vpop.xlane.xlu0 %159
    %v161 = vmax.f32 %v113, %v154
    %v162 = vsub.f32 %v113, %v161
    %v163 = vmul.f32 %v162, 1.442695
    %v164 = vpow.pop %v163
    %v165 = vmul.f32 %v119, %v164
    %v166 = vsub.f32 %v154, %v161
    %v167 = vmul.f32 %v166, 1.442695
    %v168 = vpow.pop %v167
    %v169 = vmul.f32 %v160, %v168
    %v170 = vadd.f32 %v165, %v169
    %v171 = vlog2.pop %v170
    %v172 = vmul.f32 %v171, 0.6931472
    %v173 = vadd.f32 %v172, %v161
    %vm174 = vcmask 7168
    %175 = vst.msk [vmem:[%s5] sm:$0xff] %vm174, %v173
    %v177 = vsel %vm58, %v54, 0
    %179 = vmatpush.xpose.msra.mxu0 0.0
    %180 = vmatpush.xpose.msra.mxu0 0.0
    %181 = vmatpush.xpose.msra.mxu0 0.0
    %182 = vmatpush.xpose.msra.mxu0 0.0
    %183 = vmatpush.xpose.msra.mxu0 0.0
    %184 = vmatpush.xpose.msra.mxu0 0.0
    %185 = vmatpush.xpose.msra.mxu0 0.0
    %186 = vmatpush.xpose.msra.mxu0 0.0
    %187 = vmatpush.xpose.msra.mxu0 0.0
    %188 = vmatpush.xpose.msra.mxu0 0.0
    %189 = vmatpush.xpose.msra.mxu0 0.0
    %190 = vmatpush.xpose.msra.mxu0 0.0
    %191 = vmatpush.xpose.msra.mxu0 0.0
    %192 = vmatpush.xpose.msra.mxu0 0.0
    %193 = vmatpush.xpose.msra.mxu0 0.0
    %194 = vmatpush.xpose.msra.mxu0 %v79
    %195 = vmatmul.f32.gmra.mxu0 %v177
    %v196 = vpop.f32.mrf.mxu0
    %v197 = vadd.f32 0.0, %v196
    %198 = vdwg.mxu0
    %v199 = vmul.f32 %v197, 2.0
    %v200 = vsub.f32 %v199, %v65
    %v201 = vsub.f32 %v200, %v104
    %v202 = vmin.f32 %v201, 0.0
    %v203 = vsel %vm72, %v202, -inf
    %v204 = vsel %vm109, %v203, -inf
    %205 = vmax.xlane.f32.xlu0 %v204
    %v206 = vpop.xlane.xlu0 %205
    %v207 = vmax.f32 %v206, -3.4028235e+38
    %v208 = vsub.f32 %v203, %v207
    %v209 = vmul.f32 %v208, 1.442695
    %v210 = vpow.pop %v209
    %v211 = vsel %vm109, %v210, 0.0
    %212 = vadd.xlane.f32.xlu0 %v211
    %v213 = vpop.xlane.xlu0 %212
    %214 = vmatpush.xpose.msra.mxu0 0.0
    %215 = vmatpush.xpose.msra.mxu0 0.0
    %216 = vmatpush.xpose.msra.mxu0 0.0
    %217 = vmatpush.xpose.msra.mxu0 0.0
    %218 = vmatpush.xpose.msra.mxu0 0.0
    %219 = vmatpush.xpose.msra.mxu0 0.0
    %220 = vmatpush.xpose.msra.mxu0 0.0
    %221 = vmatpush.xpose.msra.mxu0 0.0
    %222 = vmatpush.xpose.msra.mxu0 0.0
    %223 = vmatpush.xpose.msra.mxu0 0.0
    %224 = vmatpush.xpose.msra.mxu0 0.0
    %225 = vmatpush.xpose.msra.mxu0 0.0
    %226 = vmatpush.xpose.msra.mxu0 0.0
    %227 = vmatpush.xpose.msra.mxu0 0.0
    %228 = vmatpush.xpose.msra.mxu0 0.0
    %229 = vmatpush.xpose.msra.mxu0 %v121
    %230 = vmatmul.f32.gmra.mxu0 %v177
    %v231 = vpop.f32.mrf.mxu0
    %v232 = vadd.f32 0.0, %v231
    %233 = vdwg.mxu0
    %v234 = vmul.f32 %v232, 2.0
    %v235 = vsub.f32 %v234, %v65
    %v236 = vsub.f32 %v235, %v146
    %v237 = vmin.f32 %v236, 0.0
    %v238 = vsel %vm74, %v237, -inf
    %v239 = vsel %vm109, %v238, -inf
    %240 = vmax.xlane.f32.xlu0 %v239
    %v241 = vpop.xlane.xlu0 %240
    %v242 = vmax.f32 %v241, -3.4028235e+38
    %v243 = vsub.f32 %v238, %v242
    %v244 = vmul.f32 %v243, 1.442695
    %v245 = vpow.pop %v244
    %v246 = vsel %vm109, %v245, 0.0
    %247 = vadd.xlane.f32.xlu0 %v246
    %v248 = vpop.xlane.xlu0 %247
    %v249 = vmax.f32 %v207, %v242
    %v250 = vsub.f32 %v207, %v249
    %v251 = vmul.f32 %v250, 1.442695
    %v252 = vpow.pop %v251
    %v253 = vmul.f32 %v213, %v252
    %v254 = vsub.f32 %v242, %v249
    %v255 = vmul.f32 %v254, 1.442695
    %v256 = vpow.pop %v255
    %v257 = vmul.f32 %v248, %v256
    %v258 = vadd.f32 %v253, %v257
    %v259 = vlog2.pop %v258
    %v260 = vmul.f32 %v259, 0.6931472
    %v261 = vadd.f32 %v260, %v249
    %262 = vst.msk [vmem:[%s4] sm:$0xff] %vm174, %v261
    %v263 = vmul.f32 %v52, %v54
    %v264 = vsel %vm58, %v263, 0.0
    %265 = vadd.xlane.f32.xlu0 %v264
    %v266 = vpop.xlane.xlu0 %265
    %v267 = vmul.f32 %v266, 2.0
    %v268 = vsub.f32 %v267, %v61
    %v269 = vsub.f32 %v268, %v65
    %v270 = vmin.f32 %v269, 0.0
    %271 = vst.msk [vmem:[%s6] sm:$0xff] %vm174, %v270
    // Predicated region
    $region26: #{tpu_custom_call.1} parent=1 // pred_check
      _
    $region27: #{tpu_custom_call.1} parent=1 // pred_check_branch
      %273 = sbr.rel (0) target = $region29
    $region28: #{tpu_custom_call.1} parent=1 // pred_region
      _
    $region29: #{tpu_custom_call.1} parent=1 // pred_fallthru
      _
    // Predicated region
    $region30: #{tpu_custom_call.1} parent=1 // pred_check
      _
    $region31: #{tpu_custom_call.1} parent=1 // pred_check_branch
      %275 = sbr.rel (0) target = $region33
    $region32: #{tpu_custom_call.1} parent=1 // pred_region
      _
    $region33: #{tpu_custom_call.1} parent=1 // pred_fallthru
      _
    // Predicated region
    $region34: #{tpu_custom_call.1} parent=1 // pred_check
      _
    $region35: #{tpu_custom_call.1} parent=1 // pred_check_branch
      %277 = sbr.rel (0) target = $region37
    $region36: #{tpu_custom_call.1} parent=1 // pred_region
      _
    $region37: #{tpu_custom_call.1} parent=1 // pred_fallthru
      _
    // Predicated region
    $region38: #{tpu_custom_call.1} parent=1 // pred_check
      _
    $region39: #{tpu_custom_call.1} parent=1 // pred_check_branch
      %279 = sbr.rel (0) target = $region41
    $region40: #{tpu_custom_call.1} parent=1 // pred_region
      _
    $region41: #{tpu_custom_call.1} parent=1 // pred_fallthru
      _
    // Predicated region
    $region42: #{tpu_custom_call.1} parent=1 // pred_check
      _
    $region43: #{tpu_custom_call.1} parent=1 // pred_check_branch
      %281 = sbr.rel (0) target = $region45
    $region44: #{tpu_custom_call.1} parent=1 // pred_region
      _
    $region45: #{tpu_custom_call.1} parent=1 // pred_fallthru
      _
    // Predicated region
    $region46: #{tpu_custom_call.1} parent=1 // pred_check
      _
    $region47: #{tpu_custom_call.1} parent=1 // pred_check_branch
      %283 = sbr.rel (0) target = $region49
    $region48: #{tpu_custom_call.1} parent=1 // pred_region
      _
    $region49: #{tpu_custom_call.1} parent=1 // pred_fallthru
      _
    %284 = vsyncpa [#allocation3], 1
    %285 = vsyncpa [#allocation5], 1

</llo_original>
